<compile_context>
chip_gen: v6e
topology: v6e:2x2x1
jax: 0.10.0
libtpu: 0.0.40
codegen_flags: <defaults>
</compile_context>

<pallas_src>
import functools

import jax
import jax.numpy as jnp
from jax.experimental import pallas as pl
from jax.experimental.pallas import tpu as pltpu


def _round_up(n, m):
    return ((n + m - 1) // m) * m


def _default_vmem_limit():
    """Scoped-VMEM cap: ~3/4 of physical, capped at 96 MiB.

    -> ~48 MiB on v7x (64 MiB physical), 96 MiB on v5e/v6e (128 MiB physical).
    Falls back to 48 MiB (safe on every generation) if the query fails.
    """
    cap = 64 * 1024 * 1024
    try:
        cap = int(pltpu.get_tpu_info().vmem_capacity_bytes)
    except Exception:
        pass
    return int(min(96 * 1024 * 1024, cap * 3 // 4))


_VMEM_LIMIT_BYTES = _default_vmem_limit()


def fm_kernel(x_ref, vw_ref, vv_ref, b_ref, o_ref):
    """One batch tile of the FM forward.

    x_ref:  (TB, p)     batch tile (f32 or bf16; upcast in-VMEM)
    vw_ref: (p, k+1)    f32  [v | W^T]          (grid-invariant)
    vv_ref: (1, p)      f32  sum_k v[p, k]^2    (grid-invariant)
    b_ref:  (1, 1)      f32  linear bias        (SMEM scalar)
    o_ref:  (1, 1, TB)  f32  lane-dense output row for this tile
    """
    x = x_ref[...].astype(jnp.float32)          # no-op for f32 input
    vw = vw_ref[...]
    k = vw.shape[1] - 1

    # Single MXU matmul: columns [:k] give x@v, column [k] gives x@W^T.
    xvw = jnp.dot(x, vw, preferred_element_type=jnp.float32)        # (TB, k+1)
    xv = xvw[:, :k]                                                  # (TB, k)
    linear_part = xvw[:, k:]                                         # (TB, 1)

    # sum_k[(x^2)@(v^2)] == (x^2) @ rowsum_k(v^2): VPU multiply + lane reduce.
    sq_term = jnp.sum((x * x) * vv_ref[...], axis=1, keepdims=True)  # (TB, 1)
    pair = jnp.sum(xv * xv, axis=1, keepdims=True) - sq_term         # (TB, 1)

    # Dropout(0.5) in eval mode == identity.
    out = linear_part + b_ref[0, 0] + 0.5 * pair                     # (TB, 1)

    # Lane-dense store: (TB, 1) column -> (1, 1, TB) row.
    o_ref[...] = out.reshape(o_ref.shape)


@functools.partial(jax.jit, static_argnames=("block_b", "stream_bf16"))
def factorization_machine(x, v, w, b, *, block_b=512, stream_bf16=False):
    """FM forward.  x: (B, p); v: (p, k); w: (p, 1); b: (1, 1) -> (B, 1)."""
    B, p = x.shape
    k = v.shape[1]

    # Grid-invariant parameter transforms (one-time, outside the grid loop).
    vw = jnp.concatenate([v, w], axis=1).astype(jnp.float32)         # (p, k+1)
    vv_row = jnp.sum(v.astype(jnp.float32) ** 2, axis=1)[None, :]    # (1, p)
    b = jnp.asarray(b, jnp.float32).reshape(1, 1)

    # Optional bf16 streaming of the dominant HBM stream (x); f32 math stays
    # in-kernel.  Off by default: exact f32 reference numerics.
    if stream_bf16:
        if x.dtype != jnp.bfloat16:
            x = x.astype(jnp.bfloat16)
    elif x.dtype != jnp.float32:
        x = x.astype(jnp.float32)
    itemsize = jnp.dtype(x.dtype).itemsize

    # --- batch tile sizing (no padding: ragged last block) ------------------
    if B > 128:
        # (a) double-buffered x (2*TB*p*itemsize) at most half the VMEM cap;
        # (b) keep >= 2 grid tiles so v7x's two TensorCores both get work;
        # (c) multiple of 128 for a lane-dense, unmasked output store.
        vmem_cap_tb = _VMEM_LIMIT_BYTES // (4 * p * itemsize)
        vmem_cap_tb = max(128, (vmem_cap_tb // 128) * 128)
        block_b = min(block_b, vmem_cap_tb, _round_up(-(-B // 2), 128))
        block_b = max(block_b, 128)
    else:
        block_b = _round_up(max(B, 1), 8)
    assert block_b % 8 == 0, block_b  # (8,128) BlockSpec rule on the sublane dim

    num_tiles = -(-B // block_b)  # ragged: last tile's tail rows are sliced off

    out_rows = pl.pallas_call(
        fm_kernel,
        out_shape=jax.ShapeDtypeStruct((num_tiles, 1, block_b), jnp.float32),
        grid=(num_tiles,),
        in_specs=[
            pl.BlockSpec((block_b, p), lambda i: (i, 0)),       # x tile
            pl.BlockSpec((p, k + 1), lambda i: (0, 0)),         # [v | W^T]
            pl.BlockSpec((1, p), lambda i: (0, 0)),             # sum_k v^2
            pl.BlockSpec(memory_space=pltpu.MemorySpace.SMEM),  # bias scalar
        ],
        out_specs=pl.BlockSpec((1, 1, block_b), lambda i: (i, 0, 0)),
        compiler_params=pltpu.CompilerParams(
            dimension_semantics=("parallel",),
            vmem_limit_bytes=_VMEM_LIMIT_BYTES,
        ),
    )(x, vw, vv_row, b)

    # (num_tiles, 1, TB) lane-dense rows -> (B, 1) column, dropping the tail.
    return out_rows.reshape(-1)[:B].reshape(B, 1)


def fm_reference(x, v, w, b):
    linear_part = x @ w + b
    inter1 = (x @ v) ** 2
    inter2 = (x ** 2) @ (v ** 2)
    pair = jnp.sum(inter1 - inter2, axis=1, keepdims=True)
    return linear_part + 0.5 * pair


if __name__ == "__main__":
    # Small shapes consistent with the module: x is (batch, p) features.
    # B deliberately not a multiple of the tile to exercise the ragged grid.
    B, P, K = 200, 256, 32

    key = jax.random.PRNGKey(0)
    kx, kv, kw, kb = jax.random.split(key, 4)

    x = jax.random.normal(kx, (B, P), dtype=jnp.float32)

    # Deterministic parameter init (shapes from __init__):
    #   v = torch.rand(p, k) / 10
    v = jax.random.uniform(kv, (P, K), dtype=jnp.float32) / 10.0
    #   nn.Linear(p, 1): weight (1, p) -> stored transposed (p, 1), bias (1,)
    bound = 1.0 / (P ** 0.5)
    w = jax.random.uniform(kw, (P, 1), dtype=jnp.float32,
                           minval=-bound, maxval=bound)
    b = jax.random.uniform(kb, (1, 1), dtype=jnp.float32,
                           minval=-bound, maxval=bound)

    # Exact f32 path.
    out = factorization_machine(x, v, w, b)
    out = jax.block_until_ready(out)
    ref = fm_reference(x, v, w, b)
    assert out.shape == (B, 1), out.shape
    err = jnp.max(jnp.abs(out - ref))
    assert jnp.allclose(out, ref, atol=5e-4, rtol=5e-4), f"max err {err}"

    # Optional bf16-streamed path (compared against the bf16-cast input so the
    # only difference is accumulation order).
    out_bf = factorization_machine(x, v, w, b, stream_bf16=True)
    out_bf = jax.block_until_ready(out_bf)
    ref_bf = fm_reference(x.astype(jnp.bfloat16).astype(jnp.float32), v, w, b)
    err_bf = jnp.max(jnp.abs(out_bf - ref_bf))
    assert out_bf.shape == (B, 1), out_bf.shape
    assert jnp.allclose(out_bf, ref_bf, atol=2e-3, rtol=2e-3), f"bf16 max err {err_bf}"

    print("KERNEL_OK")
</pallas_src>

<mosaic_0001>
module attributes {stable_mosaic.version = 11 : i64} {
  func.func @fm_kernel(%arg0: i32, %arg1: memref<128x256xf32, #tpu.memory_space<vmem>>, %arg2: memref<256x33xf32, #tpu.memory_space<vmem>>, %arg3: memref<1x256xf32, #tpu.memory_space<vmem>>, %arg4: memref<1x1xf32, #tpu.memory_space<smem>>, %arg5: memref<1x1x128xf32, #tpu.memory_space<vmem>>) attributes {dimension_semantics = [#tpu.dimension_semantics<parallel>], iteration_bounds = array<i64: 2>, scalar_prefetch = 0 : i64, scratch_operands = 0 : i64, tpu.core_type = #tpu.core_type<tc>, window_params = [{transform_indices = @transform_0, window_bounds = array<i64: 128, 256>}, {pipeline_mode = #tpu.pipeline_mode<synchronous>, transform_indices = @transform_1, window_bounds = array<i64: 256, 33>}, {pipeline_mode = #tpu.pipeline_mode<synchronous>, transform_indices = @transform_2, window_bounds = array<i64: 1, 256>}, {transform_indices = @transform_3, window_bounds = array<i64: 1, 1>}, {transform_indices = @transform_4, window_bounds = array<i64: 1, 1, 128>}]} {
    %c0 = arith.constant 0 : index
    %c0_0 = arith.constant 0 : index
    %0 = vector.load %arg1[%c0, %c0_0] : memref<128x256xf32, #tpu.memory_space<vmem>>, vector<128x256xf32>
    %c0_1 = arith.constant 0 : index
    %c0_2 = arith.constant 0 : index
    %1 = vector.load %arg2[%c0_1, %c0_2] : memref<256x33xf32, #tpu.memory_space<vmem>>, vector<256x33xf32>
    %cst = arith.constant dense<0.000000e+00> : vector<128x33xf32>
    %2 = tpu.matmul %0, %1, %cst {dimension_numbers = #tpu.dot_dimension_numbers<[1], [0], [0], [1], [0, 0, 1, 1], [], []>} : vector<128x256xf32>, vector<256x33xf32>, vector<128x33xf32> -> vector<128x33xf32>
    %3 = vector.extract_strided_slice %2 {offsets = [0, 0], sizes = [128, 32], strides = [1, 1]} : vector<128x33xf32> to vector<128x32xf32>
    %4 = vector.extract_strided_slice %2 {offsets = [0, 32], sizes = [128, 1], strides = [1, 1]} : vector<128x33xf32> to vector<128x1xf32>
    %5 = arith.mulf %0, %0 : vector<128x256xf32>
    %c0_3 = arith.constant 0 : index
    %c0_4 = arith.constant 0 : index
    %6 = vector.load %arg3[%c0_3, %c0_4] : memref<1x256xf32, #tpu.memory_space<vmem>>, vector<1x256xf32>
    %7 = vector.broadcast %6 : vector<1x256xf32> to vector<128x256xf32>
    %8 = arith.mulf %5, %7 : vector<128x256xf32>
    %cst_5 = arith.constant dense<0.000000e+00> : vector<128xf32>
    %9 = vector.multi_reduction <add>, %8, %cst_5 [1] : vector<128x256xf32> to vector<128xf32>
    %10 = vector.shape_cast %9 : vector<128xf32> to vector<128x1xf32>
    %11 = arith.mulf %3, %3 : vector<128x32xf32>
    %cst_6 = arith.constant dense<0.000000e+00> : vector<128xf32>
    %12 = vector.multi_reduction <add>, %11, %cst_6 [1] : vector<128x32xf32> to vector<128xf32>
    %13 = vector.shape_cast %12 : vector<128xf32> to vector<128x1xf32>
    %14 = arith.subf %13, %10 : vector<128x1xf32>
    %c0_7 = arith.constant 0 : index
    %c0_8 = arith.constant 0 : index
    %15 = memref.load %arg4[%c0_7, %c0_8] : memref<1x1xf32, #tpu.memory_space<smem>>
    %16 = vector.broadcast %15 : f32 to vector<128x1xf32>
    %17 = arith.addf %4, %16 : vector<128x1xf32>
    %cst_9 = arith.constant 5.000000e-01 : f32
    %18 = vector.broadcast %cst_9 : f32 to vector<128x1xf32>
    %19 = arith.mulf %18, %14 : vector<128x1xf32>
    %20 = arith.addf %17, %19 : vector<128x1xf32>
    %21 = vector.shape_cast %20 : vector<128x1xf32> to vector<1x1x128xf32>
    %c0_10 = arith.constant 0 : index
    %c0_11 = arith.constant 0 : index
    %c0_12 = arith.constant 0 : index
    %22 = vector.load %arg5[%c0_10, %c0_11, %c0_12] : memref<1x1x128xf32, #tpu.memory_space<vmem>>, vector<1x1x128xf32>
    tpu.vector_store %arg5[%c0_10, %c0_11, %c0_12], %21 {strides = array<i32>} : memref<1x1x128xf32, #tpu.memory_space<vmem>>, vector<1x1x128xf32>,
    return
  }
  func.func @transform_0(%arg0: i32) -> (i32, i32) {
    %c0_i32 = arith.constant 0 : i32
    %c0_i32_0 = arith.constant 0 : i32
    return %arg0, %c0_i32 : i32, i32
  }
  func.func @transform_1(%arg0: i32) -> (i32, i32) {
    %c0_i32 = arith.constant 0 : i32
    %c0_i32_0 = arith.constant 0 : i32
    %c0_i32_1 = arith.constant 0 : i32
    return %c0_i32, %c0_i32_0 : i32, i32
  }
  func.func @transform_2(%arg0: i32) -> (i32, i32) {
    %c0_i32 = arith.constant 0 : i32
    %c0_i32_0 = arith.constant 0 : i32
    %c0_i32_1 = arith.constant 0 : i32
    return %c0_i32, %c0_i32_0 : i32, i32
  }
  func.func @transform_3(%arg0: i32) -> (i32, i32) {
    %c0_i32 = arith.constant 0 : i32
    %c0_i32_0 = arith.constant 0 : i32
    %c0_i32_1 = arith.constant 0 : i32
    return %c0_i32, %c0_i32_0 : i32, i32
  }
  func.func @transform_4(%arg0: i32) -> (i32, i32, i32) {
    %c0_i32 = arith.constant 0 : i32
    %c0_i32_0 = arith.constant 0 : i32
    %c0_i32_1 = arith.constant 0 : i32
    return %arg0, %c0_i32, %c0_i32_0 : i32, i32, i32
  }
}

</mosaic_0001>

<llo_original>
// kernel: factorization_machine.1
$region0: #{factorization_machine.1}
  #allocation0 [shape = 'u32[]', space=smem, size = 0x4, offset = 0x4, fixed_abs, tag = 'smem constant byte address 0x4 - core index']
  #allocation1 [shape = 'u32[144,128]{1,0:T(1,128)}', space=vmem, size = 0x12000, scoped, tag = 'internal scratch']
  #allocation2 [shape = 'f32[1,1]{1,0:T(1,128)S(6)}', space=smem, size = 0x200, scoped, tag = 'scoped memory for factorization_machine.1']
  %s0 = inlined_call_operand.vmem [shape: f32[200,256], index: 0, kind: input, shape index: {}]
  %s1 = inlined_call_operand.vmem [shape: f32[256,33], index: 1, kind: input, shape index: {}]
  %s2 = inlined_call_operand.vmem [shape: f32[1,256], index: 2, kind: input, shape index: {}]
  %s3 = inlined_call_operand.<no memory space> [shape: f32[1,1], index: 3, kind: input, shape index: {}]
  %s4 = inlined_call_operand.hbm [shape: f32[2,1,128], index: 4, kind: output, shape index: {}]
  %s5 = sld [smem:[#allocation0]]
  $region49: #{factorization_machine.1} parent=0
    _
  %s7 = ssub.s32 1, %s5
  %s8 = scalar_select 0, %s7, %s5
  %9 = sst [smem:[#allocation2]] %s3
  $region1: #{factorization_machine.1} parent=0
    #allocation3 [shape = 'u8[1024]{0}', space=vmem, size = 0x400, scoped, tag = 'output window, operand 0']
    #allocation4 [shape = 's32[2]{0}', space=sflag, size = 0x8, scoped, tag = 'scoped memory for factorization_machine.1']
    %10 = vsyncpa [#allocation4], 0
    %s11 = scalar_lea.sflag [#allocation4], 1
    %12 = vsyncpa %s11, 0
    loop: start=0, step=1, limit=4
    $region2: #{factorization_machine.1} parent=1 // loop_pre_header
      _
    $region3: #{factorization_machine.1} parent=1 // loop_header
      %s14 = sphi 0, %s18
      %p15 = scmp.ge.s32.totalorder %s14, 4
      %s24 = sphi 0, %s26
      %s27 = sphi 0, %s24
      %s28 = sphi 0, %s27
      %s44 = sphi 0, %s28
      %s48 = sphi 0, %s48
      %s50 = sphi 0, %s48
      %s51 = sphi 0, %s50
      %s65 = sphi 0, %s51
      %s69 = sphi 0, %s69
      %s71 = sphi 0, %s69
      %s72 = sphi 0, %s71
      %s86 = sphi 0, %s72
      %s90 = sphi 0, %s90
      %s92 = sphi 0, %s90
      %s93 = sphi 0, %s92
      %s107 = sphi 0, %s93
      %s113 = sphi 0, %s115
      %s116 = sphi 0, %s113
      %s117 = sphi 0, %s116
      %s133 = sphi 0, %s117
    $region4: #{factorization_machine.1} parent=1 // loop_header_branch
      %17 = sbr.rel (%p15) target = $region8
    $region5: #{factorization_machine.1} parent=1 // loop_body
      %s19 = ssub.s32 %s14, 1
      %s20 = ssub.s32 %s14, 2
      %s21 = sadd.s32 %s14, 1
      %s22 = ssub.s32 %s14, %s21
      %p23 = scmp.eq.s32.totalorder %s22, 0
      %s25 = sadd.s32 %s24, 1
      %s26 = scalar_select %p23, %s24, %s25
      %p29 = pneg %p23
      %p30 = scmp.eq.s32.totalorder %s14, 1
      %p31 = por %p29, %p30
      %p32 = scmp.ne.s32.totalorder %s24, %s27
      %p33 = scmp.eq.s32.totalorder %s14, 0
      %p34 = por %p32, %p33
      %p35 = scmp.ne.s32.totalorder %s24, %s27
      %p36 = scmp.eq.s32.totalorder %s19, 1
      %p37 = por %p35, %p36
      %p38 = scmp.ne.s32.totalorder %s27, %s28
      %p39 = scmp.eq.s32.totalorder %s19, 0
      %p40 = por %p38, %p39
      %p41 = scmp.ne.s32.totalorder %s27, %s28
      %p42 = scmp.eq.s32.totalorder %s20, 1
      %p43 = por %p41, %p42
      %p45 = scmp.ne.s32.totalorder %s28, %s44
      %p46 = scmp.eq.s32.totalorder %s20, 0
      %p47 = por %p45, %p46
      %s49 = sadd.s32 %s48, 1
      %p52 = scmp.eq.s32.totalorder %s14, 1
      %p53 = scmp.ne.s32.totalorder %s48, %s50
      %p54 = scmp.eq.s32.totalorder %s14, 0
      %p55 = por %p53, %p54
      %p56 = scmp.ne.s32.totalorder %s48, %s50
      %p57 = scmp.eq.s32.totalorder %s19, 1
      %p58 = por %p56, %p57
      %p59 = scmp.ne.s32.totalorder %s50, %s51
      %p60 = scmp.eq.s32.totalorder %s19, 0
      %p61 = por %p59, %p60
      %p62 = scmp.ne.s32.totalorder %s50, %s51
      %p63 = scmp.eq.s32.totalorder %s20, 1
      %p64 = por %p62, %p63
      %p66 = scmp.ne.s32.totalorder %s51, %s65
      %p67 = scmp.eq.s32.totalorder %s20, 0
      %p68 = por %p66, %p67
      %s70 = sadd.s32 %s69, 1
      %p73 = scmp.eq.s32.totalorder %s14, 1
      %p74 = scmp.ne.s32.totalorder %s69, %s71
      %p75 = scmp.eq.s32.totalorder %s14, 0
      %p76 = por %p74, %p75
      %p77 = scmp.ne.s32.totalorder %s69, %s71
      %p78 = scmp.eq.s32.totalorder %s19, 1
      %p79 = por %p77, %p78
      %p80 = scmp.ne.s32.totalorder %s71, %s72
      %p81 = scmp.eq.s32.totalorder %s19, 0
      %p82 = por %p80, %p81
      %p83 = scmp.ne.s32.totalorder %s71, %s72
      %p84 = scmp.eq.s32.totalorder %s20, 1
      %p85 = por %p83, %p84
      %p87 = scmp.ne.s32.totalorder %s72, %s86
      %p88 = scmp.eq.s32.totalorder %s20, 0
      %p89 = por %p87, %p88
      %s91 = sadd.s32 %s90, 1
      %p94 = scmp.eq.s32.totalorder %s14, 1
      %p95 = scmp.ne.s32.totalorder %s90, %s92
      %p96 = scmp.eq.s32.totalorder %s14, 0
      %p97 = por %p95, %p96
      %p98 = scmp.ne.s32.totalorder %s90, %s92
      %p99 = scmp.eq.s32.totalorder %s19, 1
      %p100 = por %p98, %p99
      %p101 = scmp.ne.s32.totalorder %s92, %s93
      %p102 = scmp.eq.s32.totalorder %s19, 0
      %p103 = por %p101, %p102
      %p104 = scmp.ne.s32.totalorder %s92, %s93
      %p105 = scmp.eq.s32.totalorder %s20, 1
      %p106 = por %p104, %p105
      %p108 = scmp.ne.s32.totalorder %s93, %s107
      %p109 = scmp.eq.s32.totalorder %s20, 0
      %p110 = por %p108, %p109
      %s111 = ssub.s32 %s14, %s21
      %p112 = scmp.eq.s32.totalorder %s111, 0
      %s114 = sadd.s32 %s113, 1
      %s115 = scalar_select %p112, %s113, %s114
      %p118 = pneg %p112
      %p119 = scmp.eq.s32.totalorder %s14, 1
      %p120 = por %p118, %p119
      %p121 = scmp.ne.s32.totalorder %s113, %s116
      %p122 = scmp.eq.s32.totalorder %s14, 0
      %p123 = por %p121, %p122
      %p124 = scmp.ne.s32.totalorder %s113, %s116
      %p125 = scmp.eq.s32.totalorder %s19, 1
      %p126 = por %p124, %p125
      %p127 = scmp.ne.s32.totalorder %s116, %s117
      %p128 = scmp.eq.s32.totalorder %s19, 0
      %p129 = por %p127, %p128
      %p130 = scmp.ne.s32.totalorder %s116, %s117
      %p131 = scmp.eq.s32.totalorder %s20, 1
      %p132 = por %p130, %p131
      %p134 = scmp.ne.s32.totalorder %s117, %s133
      %p135 = scmp.eq.s32.totalorder %s20, 0
      %p136 = por %p134, %p135
      %p137 = scmp.le.s32.totalorder 1, %s14
      %p138 = scmp.lt.s32.totalorder %s14, 3
      %p139 = pnand %p137, %p138
      %p140 = pneg %p139
      // Predicated region
      $region9: #{factorization_machine.1} parent=5 // pred_check
        _
      $region10: #{factorization_machine.1} parent=5 // pred_check_branch
        %142 = sbr.rel (%p139) target = $region12
      $region11: #{factorization_machine.1} parent=5 // pred_region
        %s143 = ssub.s32 %s14, 1
        // Predicated region
        $region13: #{factorization_machine.1} parent=11 // pred_check
          %p144 = pneg %p61
        $region14: #{factorization_machine.1} parent=11 // pred_check_branch
          %146 = sbr.rel (%p144) target = $region16
        $region15: #{factorization_machine.1} parent=11 // pred_region
          _
        $region16: #{factorization_machine.1} parent=11 // pred_fallthru
          _
        // Predicated region
        $region17: #{factorization_machine.1} parent=11 // pred_check
          %p147 = pneg %p82
        $region18: #{factorization_machine.1} parent=11 // pred_check_branch
          %149 = sbr.rel (%p147) target = $region20
        $region19: #{factorization_machine.1} parent=11 // pred_region
          _
        $region20: #{factorization_machine.1} parent=11 // pred_fallthru
          _
        // Predicated region
        $region21: #{factorization_machine.1} parent=11 // pred_check
          %p150 = pneg %p103
        $region22: #{factorization_machine.1} parent=11 // pred_check_branch
          %152 = sbr.rel (%p150) target = $region24
        $region23: #{factorization_machine.1} parent=11 // pred_region
          _
        $region24: #{factorization_machine.1} parent=11 // pred_fallthru
          _
      $region12: #{factorization_machine.1} parent=5 // pred_fallthru
        _
      %p153 = scmp.lt.s32.totalorder %s14, 2
      // Predicated region
      $region25: #{factorization_machine.1} parent=5 // pred_check
        %p154 = pneg %p153
      $region26: #{factorization_machine.1} parent=5 // pred_check_branch
        %156 = sbr.rel (%p154) target = $region28
      $region27: #{factorization_machine.1} parent=5 // pred_region
        // Predicated region
        $region29: #{factorization_machine.1} parent=27 // pred_check
          %p157 = pneg %p34
        $region30: #{factorization_machine.1} parent=27 // pred_check_branch
          %159 = sbr.rel (%p157) target = $region32
        $region31: #{factorization_machine.1} parent=27 // pred_region
          %s160 = smul.u32 16, %s14
          %s161 = ssub.s32 25, %s160
          %p162 = scmp.lt.s32.totalorder %s161, 16
          %s163 = scalar_select %p162, %s161, 16
          %s164 = smul.u32 128, %s163
          %s165 = smul.u32 %s164, 2
          %p166 = scmp.lt.s32.totalorder %s160, 24
          %s167 = scalar_select %p166, %s160, 24
          %s168 = smul.addr %s167, 2
          %s169 = smul.addr %s168, 8
          %s170 = scalar_lea.vmem %s0, %s169
          %s171 = smul.u32 16, %s14
          %s172 = ssub.s32 25, %s171
          %p173 = scmp.lt.s32.totalorder %s172, 16
          %s174 = scalar_select %p173, %s172, 16
          %s175 = smul.u32 128, %s174
          %s176 = smul.u32 %s175, 2
        $region32: #{factorization_machine.1} parent=27 // pred_fallthru
          _
      $region28: #{factorization_machine.1} parent=5 // pred_fallthru
        _
      %p177 = scmp.le.s32.totalorder 1, %s14
      %p178 = scmp.lt.s32.totalorder %s14, 3
      %p179 = pnand %p177, %p178
      %p180 = pneg %p179
      // Predicated region
      $region33: #{factorization_machine.1} parent=5 // pred_check
        _
      $region34: #{factorization_machine.1} parent=5 // pred_check_branch
        %182 = sbr.rel (%p179) target = $region36
      $region35: #{factorization_machine.1} parent=5 // pred_region
        %s183 = ssub.s32 %s14, 1
        %s184 = smul.u32 16, %s19
        %s185 = ssub.s32 25, %s184
        %p186 = scmp.lt.s32.totalorder %s185, 16
        %s187 = scalar_select %p186, %s185, 16
        %s188 = smul.u32 128, %s187
        %s189 = smul.u32 %s188, 2
        %p190 = scmp.lt.s32.totalorder %s184, 24
        %s191 = scalar_select %p190, %s184, 24
        %s192 = smul.addr %s191, 2
        %s193 = smul.addr %s192, 8
        %s194 = scalar_lea.vmem %s0, %s193
        %p195 = pneg %p40
        %p196 = pneg %p37
        %p197 = pneg %p61
        %p198 = pneg %p58
        %p199 = pneg %p82
        %p200 = pneg %p79
        %p201 = pneg %p103
        %p202 = pneg %p100
        %p203 = pneg %p129
        %p204 = pneg %p126
        %s205 = sand.u32 %s116, 1
        %s206 = scalar_lea.sflag [#allocation4], %s205
        %s207 = sand.u32 %s116, 1
        %s208 = scalar_lea.vmem [#allocation3], %s207
        %s209 = smul.u32 16, %s19
        %s210 = ssub.s32 25, %s209
        %p211 = scmp.lt.s32.totalorder %s210, 16
        %s212 = scalar_select %p211, %s210, 16
        %s213 = smul.u32 128, %s212
        %s214 = smul.u32 %s213, 2
        %p215 = scmp.lt.s32.totalorder %s209, 24
        %s216 = scalar_select %p215, %s209, 24
        %s217 = smul.addr %s216, 2
        %s218 = smul.addr %s217, 8
        %s219 = scalar_lea.vmem %s0, %s218
        %s220 = smul.u32 16, %s19
        %s221 = ssub.s32 25, %s220
        %p222 = scmp.lt.s32.totalorder %s221, 16
        %s223 = scalar_select %p222, %s221, 16
        %s224 = smul.u32 128, %s223
        %s225 = smul.u32 %s224, 2
        %v226 = vld [vmem:[%s219] sm:$0xff]
        %v227 = vld [vmem:[%s219 + $0x8] sm:$0xff]
        %v228 = vld [vmem:[%s219 + $0x10] sm:$0xff]
        %v229 = vld [vmem:[%s219 + $0x18] sm:$0xff]
        %v230 = vld [vmem:[%s219 + $0x20] sm:$0xff]
        %v231 = vld [vmem:[%s219 + $0x28] sm:$0xff]
        %v232 = vld [vmem:[%s219 + $0x30] sm:$0xff]
        %v233 = vld [vmem:[%s219 + $0x38] sm:$0xff]
        %v234 = vld [vmem:[%s219 + $0x40] sm:$0xff]
        %v235 = vld [vmem:[%s219 + $0x48] sm:$0xff]
        %v236 = vld [vmem:[%s219 + $0x50] sm:$0xff]
        %v237 = vld [vmem:[%s219 + $0x58] sm:$0xff]
        %v238 = vld [vmem:[%s219 + $0x60] sm:$0xff]
        %v239 = vld [vmem:[%s219 + $0x68] sm:$0xff]
        %v240 = vld [vmem:[%s219 + $0x70] sm:$0xff]
        %v241 = vld [vmem:[%s219 + $0x78] sm:$0xff]
        %v242 = vld [vmem:[%s219 + $0x80] sm:$0xff]
        %v243 = vld [vmem:[%s219 + $0x88] sm:$0xff]
        %v244 = vld [vmem:[%s219 + $0x90] sm:$0xff]
        %v245 = vld [vmem:[%s219 + $0x98] sm:$0xff]
        %v246 = vld [vmem:[%s219 + $0xa0] sm:$0xff]
        %v247 = vld [vmem:[%s219 + $0xa8] sm:$0xff]
        %v248 = vld [vmem:[%s219 + $0xb0] sm:$0xff]
        %v249 = vld [vmem:[%s219 + $0xb8] sm:$0xff]
        %v250 = vld [vmem:[%s219 + $0xc0] sm:$0xff]
        %v251 = vld [vmem:[%s219 + $0xc8] sm:$0xff]
        %v252 = vld [vmem:[%s219 + $0xd0] sm:$0xff]
        %v253 = vld [vmem:[%s219 + $0xd8] sm:$0xff]
        %v254 = vld [vmem:[%s219 + $0xe0] sm:$0xff]
        %v255 = vld [vmem:[%s219 + $0xe8] sm:$0xff]
        %v256 = vld [vmem:[%s219 + $0xf0] sm:$0xff]
        %v257 = vld [vmem:[%s219 + $0xf8] sm:$0xff]
        %v258 = vld [vmem:[%s1] sm:$0xff]
        %v259 = vld [vmem:[%s1 + $0x8] sm:$0xff]
        %v260 = vld [vmem:[%s1 + $0x10] sm:$0xff]
        %v261 = vld [vmem:[%s1 + $0x18] sm:$0xff]
        %v262 = vld [vmem:[%s1 + $0x20] sm:$0xff]
        %v263 = vld [vmem:[%s1 + $0x28] sm:$0xff]
        %v264 = vld [vmem:[%s1 + $0x30] sm:$0xff]
        %v265 = vld [vmem:[%s1 + $0x38] sm:$0xff]
        %v266 = vld [vmem:[%s1 + $0x40] sm:$0xff]
        %v267 = vld [vmem:[%s1 + $0x48] sm:$0xff]
        %v268 = vld [vmem:[%s1 + $0x50] sm:$0xff]
        %v269 = vld [vmem:[%s1 + $0x58] sm:$0xff]
        %v270 = vld [vmem:[%s1 + $0x60] sm:$0xff]
        %v271 = vld [vmem:[%s1 + $0x68] sm:$0xff]
        %v272 = vld [vmem:[%s1 + $0x70] sm:$0xff]
        %v273 = vld [vmem:[%s1 + $0x78] sm:$0xff]
        %v274 = vld [vmem:[%s1 + $0x80] sm:$0xff]
        %v275 = vld [vmem:[%s1 + $0x88] sm:$0xff]
        %v276 = vld [vmem:[%s1 + $0x90] sm:$0xff]
        %v277 = vld [vmem:[%s1 + $0x98] sm:$0xff]
        %v278 = vld [vmem:[%s1 + $0xa0] sm:$0xff]
        %v279 = vld [vmem:[%s1 + $0xa8] sm:$0xff]
        %v280 = vld [vmem:[%s1 + $0xb0] sm:$0xff]
        %v281 = vld [vmem:[%s1 + $0xb8] sm:$0xff]
        %v282 = vld [vmem:[%s1 + $0xc0] sm:$0xff]
        %v283 = vld [vmem:[%s1 + $0xc8] sm:$0xff]
        %v284 = vld [vmem:[%s1 + $0xd0] sm:$0xff]
        %v285 = vld [vmem:[%s1 + $0xd8] sm:$0xff]
        %v286 = vld [vmem:[%s1 + $0xe0] sm:$0xff]
        %v287 = vld [vmem:[%s1 + $0xe8] sm:$0xff]
        %v288 = vld [vmem:[%s1 + $0xf0] sm:$0xff]
        %v289 = vld [vmem:[%s1 + $0xf8] sm:$0xff]
        %290 = vmatprep.subr.mxu0 0.0
        %291 = vmatpush1.msra.mxu0 %v273
        %292 = vmatprep.subr.mxu0 0.0
        %293 = vmatpush1.msra.mxu0 %v272
        %294 = vmatprep.subr.mxu0 0.0
        %295 = vmatpush1.msra.mxu0 %v271
        %296 = vmatprep.subr.mxu0 0.0
        %297 = vmatpush1.msra.mxu0 %v270
        %298 = vmatprep.subr.mxu0 0.0
        %299 = vmatpush1.msra.mxu0 %v269
        %300 = vmatprep.subr.mxu0 0.0
        %301 = vmatpush1.msra.mxu0 %v268
        %302 = vmatprep.subr.mxu0 0.0
        %303 = vmatpush1.msra.mxu0 %v267
        %304 = vmatprep.subr.mxu0 0.0
        %305 = vmatpush1.msra.mxu0 %v266
        %306 = vmatprep.subr.mxu0 0.0
        %307 = vmatpush1.msra.mxu0 %v265
        %308 = vmatprep.subr.mxu0 0.0
        %309 = vmatpush1.msra.mxu0 %v264
        %310 = vmatprep.subr.mxu0 0.0
        %311 = vmatpush1.msra.mxu0 %v263
        %312 = vmatprep.subr.mxu0 0.0
        %313 = vmatpush1.msra.mxu0 %v262
        %314 = vmatprep.subr.mxu0 0.0
        %315 = vmatpush1.msra.mxu0 %v261
        %316 = vmatprep.subr.mxu0 0.0
        %317 = vmatpush1.msra.mxu0 %v260
        %318 = vmatprep.subr.mxu0 0.0
        %319 = vmatpush1.msra.mxu0 %v259
        %320 = vmatprep.subr.mxu0 0.0
        %321 = vmatpush1.msra.mxu0 %v258
        %322 = vmatprep.subr.mxu0 0.0
        %323 = vmatpush2.msra.mxu0 %v289
        %324 = vmatprep.subr.mxu0 0.0
        %325 = vmatpush2.msra.mxu0 %v288
        %326 = vmatprep.subr.mxu0 0.0
        %327 = vmatpush2.msra.mxu0 %v287
        %328 = vmatprep.subr.mxu0 0.0
        %329 = vmatpush2.msra.mxu0 %v286
        %330 = vmatprep.subr.mxu0 0.0
        %331 = vmatpush2.msra.mxu0 %v285
        %332 = vmatprep.subr.mxu0 0.0
        %333 = vmatpush2.msra.mxu0 %v284
        %334 = vmatprep.subr.mxu0 0.0
        %335 = vmatpush2.msra.mxu0 %v283
        %336 = vmatprep.subr.mxu0 0.0
        %337 = vmatpush2.msra.mxu0 %v282
        %338 = vmatprep.subr.mxu0 0.0
        %339 = vmatpush2.msra.mxu0 %v281
        %340 = vmatprep.subr.mxu0 0.0
        %341 = vmatpush2.msra.mxu0 %v280
        %342 = vmatprep.subr.mxu0 0.0
        %343 = vmatpush2.msra.mxu0 %v279
        %344 = vmatprep.subr.mxu0 0.0
        %345 = vmatpush2.msra.mxu0 %v278
        %346 = vmatprep.subr.mxu0 0.0
        %347 = vmatpush2.msra.mxu0 %v277
        %348 = vmatprep.subr.mxu0 0.0
        %349 = vmatpush2.msra.mxu0 %v276
        %350 = vmatprep.subr.mxu0 0.0
        %351 = vmatpush2.msra.mxu0 %v275
        %352 = vmatprep.subr.mxu0 0.0
        %353 = vmatpush2.msra.mxu0 %v274
        %354 = vmatprep.mubr.f32.mxu0 %v227
        %355 = vmatmul.mubr.f32.gmra.mxu0 %v226
        %v356 = vpop.f32.mrf.mxu0
        %v357 = vadd.f32 0.0, %v356
        %v358 = vpop.f32.mrf.mxu0
        %359 = vmatprep.mubr.f32.mxu0 %v229
        %360 = vmatmul.mubr.f32.gmra.mxu0 %v228
        %v361 = vpop.f32.mrf.mxu0
        %v362 = vadd.f32 0.0, %v361
        %v363 = vpop.f32.mrf.mxu0
        %364 = vmatprep.mubr.f32.mxu0 %v231
        %365 = vmatmul.mubr.f32.gmra.mxu0 %v230
        %v366 = vpop.f32.mrf.mxu0
        %v367 = vadd.f32 0.0, %v366
        %v368 = vpop.f32.mrf.mxu0
        %369 = vmatprep.mubr.f32.mxu0 %v233
        %370 = vmatmul.mubr.f32.gmra.mxu0 %v232
        %v371 = vpop.f32.mrf.mxu0
        %v372 = vadd.f32 0.0, %v371
        %v373 = vpop.f32.mrf.mxu0
        %374 = vmatprep.mubr.f32.mxu0 %v235
        %375 = vmatmul.mubr.f32.gmra.mxu0 %v234
        %v376 = vpop.f32.mrf.mxu0
        %v377 = vadd.f32 0.0, %v376
        %v378 = vpop.f32.mrf.mxu0
        %379 = vmatprep.mubr.f32.mxu0 %v237
        %380 = vmatmul.mubr.f32.gmra.mxu0 %v236
        %v381 = vpop.f32.mrf.mxu0
        %v382 = vadd.f32 0.0, %v381
        %v383 = vpop.f32.mrf.mxu0
        %384 = vmatprep.mubr.f32.mxu0 %v239
        %385 = vmatmul.mubr.f32.gmra.mxu0 %v238
        %v386 = vpop.f32.mrf.mxu0
        %v387 = vadd.f32 0.0, %v386
        %v388 = vpop.f32.mrf.mxu0
        %389 = vmatprep.mubr.f32.mxu0 %v241
        %390 = vmatmul.mubr.f32.gmra.mxu0 %v240
        %v391 = vpop.f32.mrf.mxu0
        %v392 = vadd.f32 0.0, %v391
        %v393 = vpop.f32.mrf.mxu0
        %394 = vmatprep.mubr.f32.mxu0 %v243
        %395 = vmatmul.mubr.f32.gmra.mxu0 %v242
        %v396 = vpop.f32.mrf.mxu0
        %v397 = vadd.f32 0.0, %v396
        %v398 = vpop.f32.mrf.mxu0
        %399 = vmatprep.mubr.f32.mxu0 %v245
        %400 = vmatmul.mubr.f32.gmra.mxu0 %v244
        %v401 = vpop.f32.mrf.mxu0
        %v402 = vadd.f32 0.0, %v401
        %v403 = vpop.f32.mrf.mxu0
        %404 = vmatprep.mubr.f32.mxu0 %v247
        %405 = vmatmul.mubr.f32.gmra.mxu0 %v246
        %v406 = vpop.f32.mrf.mxu0
        %v407 = vadd.f32 0.0, %v406
        %v408 = vpop.f32.mrf.mxu0
        %409 = vmatprep.mubr.f32.mxu0 %v249
        %410 = vmatmul.mubr.f32.gmra.mxu0 %v248
        %v411 = vpop.f32.mrf.mxu0
        %v412 = vadd.f32 0.0, %v411
        %v413 = vpop.f32.mrf.mxu0
        %414 = vmatprep.mubr.f32.mxu0 %v251
        %415 = vmatmul.mubr.f32.gmra.mxu0 %v250
        %v416 = vpop.f32.mrf.mxu0
        %v417 = vadd.f32 0.0, %v416
        %v418 = vpop.f32.mrf.mxu0
        %419 = vmatprep.mubr.f32.mxu0 %v253
        %420 = vmatmul.mubr.f32.gmra.mxu0 %v252
        %v421 = vpop.f32.mrf.mxu0
        %v422 = vadd.f32 0.0, %v421
        %v423 = vpop.f32.mrf.mxu0
        %424 = vmatprep.mubr.f32.mxu0 %v255
        %425 = vmatmul.mubr.f32.gmra.mxu0 %v254
        %v426 = vpop.f32.mrf.mxu0
        %v427 = vadd.f32 0.0, %v426
        %v428 = vpop.f32.mrf.mxu0
        %429 = vmatprep.mubr.f32.mxu0 %v257
        %430 = vmatmul.mubr.f32.gmra.mxu0 %v256
        %v431 = vpop.f32.mrf.mxu0
        %v432 = vadd.f32 0.0, %v431
        %v433 = vpop.f32.mrf.mxu0
        %434 = vdwg.mxu0
        %v435 = vmul.f32 %v226, %v226
        %v436 = vmul.f32 %v227, %v227
        %v437 = vmul.f32 %v228, %v228
        %v438 = vmul.f32 %v229, %v229
        %v439 = vmul.f32 %v230, %v230
        %v440 = vmul.f32 %v231, %v231
        %v441 = vmul.f32 %v232, %v232
        %v442 = vmul.f32 %v233, %v233
        %v443 = vmul.f32 %v234, %v234
        %v444 = vmul.f32 %v235, %v235
        %v445 = vmul.f32 %v236, %v236
        %v446 = vmul.f32 %v237, %v237
        %v447 = vmul.f32 %v238, %v238
        %v448 = vmul.f32 %v239, %v239
        %v449 = vmul.f32 %v240, %v240
        %v450 = vmul.f32 %v241, %v241
        %v451 = vmul.f32 %v242, %v242
        %v452 = vmul.f32 %v243, %v243
        %v453 = vmul.f32 %v244, %v244
        %v454 = vmul.f32 %v245, %v245
        %v455 = vmul.f32 %v246, %v246
        %v456 = vmul.f32 %v247, %v247
        %v457 = vmul.f32 %v248, %v248
        %v458 = vmul.f32 %v249, %v249
        %v459 = vmul.f32 %v250, %v250
        %v460 = vmul.f32 %v251, %v251
        %v461 = vmul.f32 %v252, %v252
        %v462 = vmul.f32 %v253, %v253
        %v463 = vmul.f32 %v254, %v254
        %v464 = vmul.f32 %v255, %v255
        %v465 = vmul.f32 %v256, %v256
        %v466 = vmul.f32 %v257, %v257
        %v467 = vld [vmem:[%s2] sm:$0x3]
        %v469 = vlaneseq
        %v470 = vshrl.u32 %v469, 7
        %v471 = vsub.s32 0, %v470
        %v472 = vrot.slane %v467, %v471
        %v473 = vlaneseq
        %v474 = vshrl.u32 %v473, 7
        %v475 = vsub.s32 1, %v474
        %v476 = vrot.slane %v467, %v475
        %v479 = vmul.f32 %v435, %v472
        %v480 = vmul.f32 %v436, %v476
        %v481 = vmul.f32 %v437, %v472
        %v482 = vmul.f32 %v438, %v476
        %v483 = vmul.f32 %v439, %v472
        %v484 = vmul.f32 %v440, %v476
        %v485 = vmul.f32 %v441, %v472
        %v486 = vmul.f32 %v442, %v476
        %v487 = vmul.f32 %v443, %v472
        %v488 = vmul.f32 %v444, %v476
        %v489 = vmul.f32 %v445, %v472
        %v490 = vmul.f32 %v446, %v476
        %v491 = vmul.f32 %v447, %v472
        %v492 = vmul.f32 %v448, %v476
        %v493 = vmul.f32 %v449, %v472
        %v494 = vmul.f32 %v450, %v476
        %v495 = vmul.f32 %v451, %v472
        %v496 = vmul.f32 %v452, %v476
        %v497 = vmul.f32 %v453, %v472
        %v498 = vmul.f32 %v454, %v476
        %v499 = vmul.f32 %v455, %v472
        %v500 = vmul.f32 %v456, %v476
        %v501 = vmul.f32 %v457, %v472
        %v502 = vmul.f32 %v458, %v476
        %v503 = vmul.f32 %v459, %v472
        %v504 = vmul.f32 %v460, %v476
        %v505 = vmul.f32 %v461, %v472
        %v506 = vmul.f32 %v462, %v476
        %v507 = vmul.f32 %v463, %v472
        %v508 = vmul.f32 %v464, %v476
        %v509 = vmul.f32 %v465, %v472
        %v510 = vmul.f32 %v466, %v476
        %v511 = vadd.f32 %v479, %v480
        %512 = vadd.xlane.f32.xlu0 %v511
        %v513 = vpop.xlane.xlu0 %512
        %v514 = vadd.f32 %v481, %v482
        %515 = vadd.xlane.f32.xlu0 %v514
        %v516 = vpop.xlane.xlu0 %515
        %v517 = vadd.f32 %v483, %v484
        %518 = vadd.xlane.f32.xlu0 %v517
        %v519 = vpop.xlane.xlu0 %518
        %v520 = vadd.f32 %v485, %v486
        %521 = vadd.xlane.f32.xlu0 %v520
        %v522 = vpop.xlane.xlu0 %521
        %v523 = vadd.f32 %v487, %v488
        %524 = vadd.xlane.f32.xlu0 %v523
        %v525 = vpop.xlane.xlu0 %524
        %v526 = vadd.f32 %v489, %v490
        %527 = vadd.xlane.f32.xlu0 %v526
        %v528 = vpop.xlane.xlu0 %527
        %v529 = vadd.f32 %v491, %v492
        %530 = vadd.xlane.f32.xlu0 %v529
        %v531 = vpop.xlane.xlu0 %530
        %v532 = vadd.f32 %v493, %v494
        %533 = vadd.xlane.f32.xlu0 %v532
        %v534 = vpop.xlane.xlu0 %533
        %v535 = vadd.f32 %v495, %v496
        %536 = vadd.xlane.f32.xlu0 %v535
        %v537 = vpop.xlane.xlu0 %536
        %v538 = vadd.f32 %v497, %v498
        %539 = vadd.xlane.f32.xlu0 %v538
        %v540 = vpop.xlane.xlu0 %539
        %v541 = vadd.f32 %v499, %v500
        %542 = vadd.xlane.f32.xlu0 %v541
        %v543 = vpop.xlane.xlu0 %542
        %v544 = vadd.f32 %v501, %v502
        %545 = vadd.xlane.f32.xlu0 %v544
        %v546 = vpop.xlane.xlu0 %545
        %v547 = vadd.f32 %v503, %v504
        %548 = vadd.xlane.f32.xlu0 %v547
        %v549 = vpop.xlane.xlu0 %548
        %v550 = vadd.f32 %v505, %v506
        %551 = vadd.xlane.f32.xlu0 %v550
        %v552 = vpop.xlane.xlu0 %551
        %v553 = vadd.f32 %v507, %v508
        %554 = vadd.xlane.f32.xlu0 %v553
        %v555 = vpop.xlane.xlu0 %554
        %v556 = vadd.f32 %v509, %v510
        %557 = vadd.xlane.f32.xlu0 %v556
        %v558 = vpop.xlane.xlu0 %557
        %v559 = vmul.f32 %v357, %v357
        %v560 = vmul.f32 %v362, %v362
        %v561 = vmul.f32 %v367, %v367
        %v562 = vmul.f32 %v372, %v372
        %v563 = vmul.f32 %v377, %v377
        %v564 = vmul.f32 %v382, %v382
        %v565 = vmul.f32 %v387, %v387
        %v566 = vmul.f32 %v392, %v392
        %v567 = vmul.f32 %v397, %v397
        %v568 = vmul.f32 %v402, %v402
        %v569 = vmul.f32 %v407, %v407
        %v570 = vmul.f32 %v412, %v412
        %v571 = vmul.f32 %v417, %v417
        %v572 = vmul.f32 %v422, %v422
        %v573 = vmul.f32 %v427, %v427
        %v574 = vmul.f32 %v432, %v432
        %vm575 = vcmask 261120
        %v576 = vsel %vm575, %v559, 0.0
        %577 = vadd.xlane.f32.xlu0 %v576
        %v578 = vpop.xlane.xlu0 %577
        %v579 = vsel %vm575, %v560, 0.0
        %580 = vadd.xlane.f32.xlu0 %v579
        %v581 = vpop.xlane.xlu0 %580
        %v582 = vsel %vm575, %v561, 0.0
        %583 = vadd.xlane.f32.xlu0 %v582
        %v584 = vpop.xlane.xlu0 %583
        %v585 = vsel %vm575, %v562, 0.0
        %586 = vadd.xlane.f32.xlu0 %v585
        %v587 = vpop.xlane.xlu0 %586
        %v588 = vsel %vm575, %v563, 0.0
        %589 = vadd.xlane.f32.xlu0 %v588
        %v590 = vpop.xlane.xlu0 %589
        %v591 = vsel %vm575, %v564, 0.0
        %592 = vadd.xlane.f32.xlu0 %v591
        %v593 = vpop.xlane.xlu0 %592
        %v594 = vsel %vm575, %v565, 0.0
        %595 = vadd.xlane.f32.xlu0 %v594
        %v596 = vpop.xlane.xlu0 %595
        %v597 = vsel %vm575, %v566, 0.0
        %598 = vadd.xlane.f32.xlu0 %v597
        %v599 = vpop.xlane.xlu0 %598
        %v600 = vsel %vm575, %v567, 0.0
        %601 = vadd.xlane.f32.xlu0 %v600
        %v602 = vpop.xlane.xlu0 %601
        %v603 = vsel %vm575, %v568, 0.0
        %604 = vadd.xlane.f32.xlu0 %v603
        %v605 = vpop.xlane.xlu0 %604
        %v606 = vsel %vm575, %v569, 0.0
        %607 = vadd.xlane.f32.xlu0 %v606
        %v608 = vpop.xlane.xlu0 %607
        %v609 = vsel %vm575, %v570, 0.0
        %610 = vadd.xlane.f32.xlu0 %v609
        %v611 = vpop.xlane.xlu0 %610
        %v612 = vsel %vm575, %v571, 0.0
        %613 = vadd.xlane.f32.xlu0 %v612
        %v614 = vpop.xlane.xlu0 %613
        %v615 = vsel %vm575, %v572, 0.0
        %616 = vadd.xlane.f32.xlu0 %v615
        %v617 = vpop.xlane.xlu0 %616
        %v618 = vsel %vm575, %v573, 0.0
        %619 = vadd.xlane.f32.xlu0 %v618
        %v620 = vpop.xlane.xlu0 %619
        %v621 = vsel %vm575, %v574, 0.0
        %622 = vadd.xlane.f32.xlu0 %v621
        %v623 = vpop.xlane.xlu0 %622
        %v624 = vsub.f32 %v578, %v513
        %v625 = vsub.f32 %v581, %v516
        %v626 = vsub.f32 %v584, %v519
        %v627 = vsub.f32 %v587, %v522
        %v628 = vsub.f32 %v590, %v525
        %v629 = vsub.f32 %v593, %v528
        %v630 = vsub.f32 %v596, %v531
        %v631 = vsub.f32 %v599, %v534
        %v632 = vsub.f32 %v602, %v537
        %v633 = vsub.f32 %v605, %v540
        %v634 = vsub.f32 %v608, %v543
        %v635 = vsub.f32 %v611, %v546
        %v636 = vsub.f32 %v614, %v549
        %v637 = vsub.f32 %v617, %v552
        %v638 = vsub.f32 %v620, %v555
        %v639 = vsub.f32 %v623, %v558
        %s640 = sld [smem:[#allocation2]]
        %v641 = vstv %s640
        %v642 = vadd.f32 %v357, %v641
        %v643 = vadd.f32 %v362, %v641
        %v644 = vadd.f32 %v367, %v641
        %v645 = vadd.f32 %v372, %v641
        %v646 = vadd.f32 %v377, %v641
        %v647 = vadd.f32 %v382, %v641
        %v648 = vadd.f32 %v387, %v641
        %v649 = vadd.f32 %v392, %v641
        %v650 = vadd.f32 %v397, %v641
        %v651 = vadd.f32 %v402, %v641
        %v652 = vadd.f32 %v407, %v641
        %v653 = vadd.f32 %v412, %v641
        %v654 = vadd.f32 %v417, %v641
        %v655 = vadd.f32 %v422, %v641
        %v656 = vadd.f32 %v427, %v641
        %v657 = vadd.f32 %v432, %v641
        %v658 = vmul.f32 %v624, 0.5
        %v659 = vmul.f32 %v625, 0.5
        %v660 = vmul.f32 %v626, 0.5
        %v661 = vmul.f32 %v627, 0.5
        %v662 = vmul.f32 %v628, 0.5
        %v663 = vmul.f32 %v629, 0.5
        %v664 = vmul.f32 %v630, 0.5
        %v665 = vmul.f32 %v631, 0.5
        %v666 = vmul.f32 %v632, 0.5
        %v667 = vmul.f32 %v633, 0.5
        %v668 = vmul.f32 %v634, 0.5
        %v669 = vmul.f32 %v635, 0.5
        %v670 = vmul.f32 %v636, 0.5
        %v671 = vmul.f32 %v637, 0.5
        %v672 = vmul.f32 %v638, 0.5
        %v673 = vmul.f32 %v639, 0.5
        %v674 = vadd.f32 %v642, %v658
        %v675 = vadd.f32 %v643, %v659
        %v676 = vadd.f32 %v644, %v660
        %v677 = vadd.f32 %v645, %v661
        %v678 = vadd.f32 %v646, %v662
        %v679 = vadd.f32 %v647, %v663
        %v680 = vadd.f32 %v648, %v664
        %v681 = vadd.f32 %v649, %v665
        %v682 = vadd.f32 %v650, %v666
        %v683 = vadd.f32 %v651, %v667
        %v684 = vadd.f32 %v652, %v668
        %v685 = vadd.f32 %v653, %v669
        %v686 = vadd.f32 %v654, %v670
        %v687 = vadd.f32 %v655, %v671
        %v688 = vadd.f32 %v656, %v672
        %v689 = vadd.f32 %v657, %v673
        %706 = vset.pattern.permute.xlu0 32
        %707 = vperm.xlu0 %706, %v674
        %v708 = vpop.permute.xlu0 %707
        %709 = vset.pattern.permute.xlu0 32
        %710 = vperm.xlu0 %709, %v675
        %v711 = vpop.permute.xlu0 %710
        %712 = vset.pattern.permute.xlu0 32
        %713 = vperm.xlu0 %712, %v676
        %v714 = vpop.permute.xlu0 %713
        %715 = vset.pattern.permute.xlu0 32
        %716 = vperm.xlu0 %715, %v677
        %v717 = vpop.permute.xlu0 %716
        %718 = vset.pattern.permute.xlu0 32
        %719 = vperm.xlu0 %718, %v678
        %v720 = vpop.permute.xlu0 %719
        %721 = vset.pattern.permute.xlu0 32
        %722 = vperm.xlu0 %721, %v679
        %v723 = vpop.permute.xlu0 %722
        %724 = vset.pattern.permute.xlu0 32
        %725 = vperm.xlu0 %724, %v680
        %v726 = vpop.permute.xlu0 %725
        %727 = vset.pattern.permute.xlu0 32
        %728 = vperm.xlu0 %727, %v681
        %v729 = vpop.permute.xlu0 %728
        %730 = vset.pattern.permute.xlu0 32
        %731 = vperm.xlu0 %730, %v682
        %v732 = vpop.permute.xlu0 %731
        %733 = vset.pattern.permute.xlu0 32
        %734 = vperm.xlu0 %733, %v683
        %v735 = vpop.permute.xlu0 %734
        %736 = vset.pattern.permute.xlu0 32
        %737 = vperm.xlu0 %736, %v684
        %v738 = vpop.permute.xlu0 %737
        %739 = vset.pattern.permute.xlu0 32
        %740 = vperm.xlu0 %739, %v685
        %v741 = vpop.permute.xlu0 %740
        %742 = vset.pattern.permute.xlu0 32
        %743 = vperm.xlu0 %742, %v686
        %v744 = vpop.permute.xlu0 %743
        %745 = vset.pattern.permute.xlu0 32
        %746 = vperm.xlu0 %745, %v687
        %v747 = vpop.permute.xlu0 %746
        %748 = vset.pattern.permute.xlu0 32
        %749 = vperm.xlu0 %748, %v688
        %v750 = vpop.permute.xlu0 %749
        %751 = vset.pattern.permute.xlu0 32
        %752 = vperm.xlu0 %751, %v689
        %v753 = vpop.permute.xlu0 %752
        %v754 = vlaneseq
        %v755 = vand.u32 %v754, 127
        %v756 = vlaneseq
        %v757 = vshrl.u32 %v756, 7
        %v758 = vsub.s32 %v755, %v757
        %v759 = vrot.slane %v708, %v758
        %v760 = vadd.s32 %v755, 4294967288
        %v761 = vlaneseq
        %v762 = vshrl.u32 %v761, 7
        %v763 = vsub.s32 %v760, %v762
        %v764 = vrot.slane %v711, %v763
        %vm765 = vcmask 130112
        %v766 = vsel %vm765, %v764, %v759
        %v767 = vadd.s32 %v755, 4294967280
        %v768 = vlaneseq
        %v769 = vshrl.u32 %v768, 7
        %v770 = vsub.s32 %v767, %v769
        %v771 = vrot.slane %v714, %v770
        %vm772 = vcmask 195712
        %v773 = vsel %vm772, %v771, %v766
        %v774 = vadd.s32 %v755, 4294967272
        %v775 = vlaneseq
        %v776 = vshrl.u32 %v775, 7
        %v777 = vsub.s32 %v774, %v776
        %v778 = vrot.slane %v717, %v777
        %vm779 = vcmask 261312
        %v780 = vsel %vm779, %v778, %v773
        %v781 = vadd.s32 %v755, 4294967264
        %v782 = vlaneseq
        %v783 = vshrl.u32 %v782, 7
        %v784 = vsub.s32 %v781, %v783
        %v785 = vrot.slane %v720, %v784
        %vm786 = vcmask 326912
        %v787 = vsel %vm786, %v785, %v780
        %v788 = vadd.s32 %v755, 4294967256
        %v789 = vlaneseq
        %v790 = vshrl.u32 %v789, 7
        %v791 = vsub.s32 %v788, %v790
        %v792 = vrot.slane %v723, %v791
        %vm793 = vcmask 392512
        %v794 = vsel %vm793, %v792, %v787
        %v795 = vadd.s32 %v755, 4294967248
        %v796 = vlaneseq
        %v797 = vshrl.u32 %v796, 7
        %v798 = vsub.s32 %v795, %v797
        %v799 = vrot.slane %v726, %v798
        %vm800 = vcmask 458112
        %v801 = vsel %vm800, %v799, %v794
        %v802 = vadd.s32 %v755, 4294967240
        %v803 = vlaneseq
        %v804 = vshrl.u32 %v803, 7
        %v805 = vsub.s32 %v802, %v804
        %v806 = vrot.slane %v729, %v805
        %vm807 = vcmask 523712
        %v808 = vsel %vm807, %v806, %v801
        %v809 = vadd.s32 %v755, 4294967232
        %v810 = vlaneseq
        %v811 = vshrl.u32 %v810, 7
        %v812 = vsub.s32 %v809, %v811
        %v813 = vrot.slane %v732, %v812
        %vm814 = vcmask 589312
        %v815 = vsel %vm814, %v813, %v808
        %v816 = vadd.s32 %v755, 4294967224
        %v817 = vlaneseq
        %v818 = vshrl.u32 %v817, 7
        %v819 = vsub.s32 %v816, %v818
        %v820 = vrot.slane %v735, %v819
        %vm821 = vcmask 654912
        %v822 = vsel %vm821, %v820, %v815
        %v823 = vadd.s32 %v755, 4294967216
        %v824 = vlaneseq
        %v825 = vshrl.u32 %v824, 7
        %v826 = vsub.s32 %v823, %v825
        %v827 = vrot.slane %v738, %v826
        %vm828 = vcmask 720512
        %v829 = vsel %vm828, %v827, %v822
        %v830 = vadd.s32 %v755, 4294967208
        %v831 = vlaneseq
        %v832 = vshrl.u32 %v831, 7
        %v833 = vsub.s32 %v830, %v832
        %v834 = vrot.slane %v741, %v833
        %vm835 = vcmask 786112
        %v836 = vsel %vm835, %v834, %v829
        %v837 = vadd.s32 %v755, 4294967200
        %v838 = vlaneseq
        %v839 = vshrl.u32 %v838, 7
        %v840 = vsub.s32 %v837, %v839
        %v841 = vrot.slane %v744, %v840
        %vm842 = vcmask 851712
        %v843 = vsel %vm842, %v841, %v836
        %v844 = vadd.s32 %v755, 4294967192
        %v845 = vlaneseq
        %v846 = vshrl.u32 %v845, 7
        %v847 = vsub.s32 %v844, %v846
        %v848 = vrot.slane %v747, %v847
        %vm849 = vcmask 917312
        %v850 = vsel %vm849, %v848, %v843
        %v851 = vadd.s32 %v755, 4294967184
        %v852 = vlaneseq
        %v853 = vshrl.u32 %v852, 7
        %v854 = vsub.s32 %v851, %v853
        %v855 = vrot.slane %v750, %v854
        %vm856 = vcmask 982912
        %v857 = vsel %vm856, %v855, %v850
        %v858 = vadd.s32 %v755, 4294967176
        %v859 = vlaneseq
        %v860 = vshrl.u32 %v859, 7
        %v861 = vsub.s32 %v858, %v860
        %v862 = vrot.slane %v753, %v861
        %vm863 = vcmask 1048512
        %v864 = vsel %vm863, %v862, %v857
        %866 = vst [vmem:[%s208] sm:$0x1] %v864
        %s867 = sand.u32 %s116, 1
        %s868 = scalar_lea.sflag [#allocation4], %s867
        %s869 = sand.u32 %s116, 1
        %s870 = scalar_lea.vmem [#allocation3], %s869
        // Predicated region
        $region37: #{factorization_machine.1} parent=35 // pred_check
          %p871 = pneg %p126
        $region38: #{factorization_machine.1} parent=35 // pred_check_branch
          %873 = sbr.rel (%p871) target = $region40
        $region39: #{factorization_machine.1} parent=35 // pred_region
          %s875 = ssub.s32 16, 16
          %876 = vsyncadd %s868, %s875
          %s877 = smul.addr %s19, 16
          %s878 = scalar_lea.hbm %s4, %s877
          %s880 = sshll.u32 %s870, 4
          %s881 = int_to_ptr.vmem [resolvable:$true] %s880
          %883 = dma.vmem_to_hbm [thread:$0]  %s881, 16, %s878, %s868
        $region40: #{factorization_machine.1} parent=35 // pred_fallthru
          _
      $region36: #{factorization_machine.1} parent=5 // pred_fallthru
        _
      %p884 = scmp.le.s32.totalorder 2, %s14
      // Predicated region
      $region41: #{factorization_machine.1} parent=5 // pred_check
        %p885 = pneg %p884
      $region42: #{factorization_machine.1} parent=5 // pred_check_branch
        %887 = sbr.rel (%p885) target = $region44
      $region43: #{factorization_machine.1} parent=5 // pred_region
        %s888 = ssub.s32 %s14, 2
        // Predicated region
        $region45: #{factorization_machine.1} parent=43 // pred_check
          %p889 = pneg %p132
        $region46: #{factorization_machine.1} parent=43 // pred_check_branch
          %891 = sbr.rel (%p889) target = $region48
        $region47: #{factorization_machine.1} parent=43 // pred_region
          %s892 = sand.u32 %s117, 1
          %s893 = scalar_lea.sflag [#allocation4], %s892
          %s894 = sand.u32 %s117, 1
          %s895 = scalar_lea.vmem [#allocation3], %s894
          %896 = dma.done %s893, 16
        $region48: #{factorization_machine.1} parent=43 // pred_fallthru
          _
      $region44: #{factorization_machine.1} parent=5 // pred_fallthru
        _
    $region6: #{factorization_machine.1} parent=1 // loop_footer
      %s18 = sadd.s32 1, %s14
    $region7: #{factorization_machine.1} parent=1 // loop_footer_branch
      %13 = sbr.rel target = $region3
    $region8: #{factorization_machine.1} parent=1 // loop_exit
      _
    %897 = vsyncpa [#allocation4], 1
    %s898 = scalar_lea.sflag [#allocation4], 1
    %899 = vsyncpa %s898, 1

</llo_original>
